<compile_context>
chip_gen: v6e
topology: v6e:2x2x1
jax: 0.10.0
libtpu: 0.0.40
codegen_flags: <defaults>
</compile_context>

<pallas_src>
import functools

import jax
import jax.numpy as jnp
from jax.experimental import pallas as pl
from jax.experimental.pallas import tpu as pltpu


def _round_up(n, m):
    return ((n + m - 1) // m) * m


def _gaussian_policy_kernel(
    x_ref,      # (TB, D_in)  bf16
    w1_ref,     # (D_in, H)   bf16
    b1_ref,     # (1, H)      f32
    w2_ref,     # (H, H)      bf16
    b2_ref,     # (1, H)      f32
    wh_ref,     # (H, NP)     bf16   [Wm | Ws | 0-pad] along lanes
    bh_ref,     # (1, NP)     f32    [bm | bs | 0-pad]
    out_ref,    # (TB, NP)    f32    [mean | std | junk]
    *,
    action_dim,
):
    # Layer 1: Linear + ReLU  (bf16 MXU inputs, f32 accumulation & elementwise)
    h = jnp.dot(x_ref[...], w1_ref[...], preferred_element_type=jnp.float32)
    h = jnp.maximum(h + b1_ref[...], 0.0)

    # Layer 2: Linear + ReLU
    h = jnp.dot(h.astype(jnp.bfloat16), w2_ref[...],
                preferred_element_type=jnp.float32)
    h = jnp.maximum(h + b2_ref[...], 0.0)

    # Fused heads: one MXU push produces [mean | log_std | pad] in one slab.
    y = jnp.dot(h.astype(jnp.bfloat16), wh_ref[...],
                preferred_element_type=jnp.float32) + bh_ref[...]

    # Apply clamp+exp only on the log_std lanes; mean lanes pass through.
    lane = jax.lax.broadcasted_iota(jnp.int32, y.shape, dimension=1)
    is_std = (lane >= action_dim) & (lane < 2 * action_dim)
    std_val = jnp.exp(jnp.clip(y, -20.0, 2.0))

    # Single lane-dense (TB, NP) unmasked store.
    out_ref[...] = jnp.where(is_std, std_val, y)


@functools.partial(jax.jit, static_argnames=("action_dim",))
def gaussian_policy_forward(x, packed_params, action_dim):
    """Runs the whole MLP with a batch-tiled grid; weights stay VMEM-resident."""
    w1, b1, w2, b2, wh, bh = packed_params
    B, D_in = x.shape
    H = w1.shape[1]
    NP = wh.shape[1]
    A = action_dim

    # Batch tile: up to 256 rows (MXU width on v6e/v7x); pad batch to a multiple.
    TB = min(256, _round_up(B, 8))
    B_pad = _round_up(B, TB)

    xb = x.astype(jnp.bfloat16)
    if B_pad != B:
        xb = jnp.pad(xb, ((0, B_pad - B), (0, 0)))

    vmem = pltpu.MemorySpace.VMEM
    out = pl.pallas_call(
        functools.partial(_gaussian_policy_kernel, action_dim=A),
        out_shape=jax.ShapeDtypeStruct((B_pad, NP), jnp.float32),
        grid=(B_pad // TB,),
        in_specs=[
            pl.BlockSpec((TB, D_in), lambda i: (i, 0), memory_space=vmem),
            # Weights/biases: constant block index -> resident across grid steps.
            pl.BlockSpec((D_in, H), lambda i: (0, 0), memory_space=vmem),
            pl.BlockSpec((1, H),    lambda i: (0, 0), memory_space=vmem),
            pl.BlockSpec((H, H),    lambda i: (0, 0), memory_space=vmem),
            pl.BlockSpec((1, H),    lambda i: (0, 0), memory_space=vmem),
            pl.BlockSpec((H, NP),   lambda i: (0, 0), memory_space=vmem),
            pl.BlockSpec((1, NP),   lambda i: (0, 0), memory_space=vmem),
        ],
        out_specs=pl.BlockSpec((TB, NP), lambda i: (i, 0), memory_space=vmem),
        compiler_params=pltpu.CompilerParams(
            dimension_semantics=("parallel",),
        ),
    )(xb, w1, b1, w2, b2, wh, bh)

    mean = out[:B, :A]
    std = out[:B, A:2 * A]
    return mean, std


def _xavier_uniform(key, fan_in, fan_out):
    # Matches torch.nn.init.xavier_uniform_ (gain=1).
    limit = jnp.sqrt(6.0 / (fan_in + fan_out))
    return jax.random.uniform(
        key, (fan_in, fan_out), dtype=jnp.float32, minval=-limit, maxval=limit
    )


def init_gaussian_policy_params(key, input_dim, action_dim, hidden=256):
    """Xavier-uniform weights, zero biases (as in init_weights). Raw f32 params."""
    k1, k2, k3, k4 = jax.random.split(key, 4)
    w1 = _xavier_uniform(k1, input_dim, hidden)
    b1 = jnp.zeros((1, hidden), jnp.float32)
    w2 = _xavier_uniform(k2, hidden, hidden)
    b2 = jnp.zeros((1, hidden), jnp.float32)
    wm = _xavier_uniform(k3, hidden, action_dim)
    bm = jnp.zeros((1, action_dim), jnp.float32)
    ws = _xavier_uniform(k4, hidden, action_dim)
    bs = jnp.zeros((1, action_dim), jnp.float32)
    return (w1, b1, w2, b2, wm, bm, ws, bs)


def pack_gaussian_policy_params(raw_params):
    """Fuse mean/log_std heads into one lane-padded weight; cast weights to bf16."""
    w1, b1, w2, b2, wm, bm, ws, bs = raw_params
    H, A = wm.shape
    NP = max(128, _round_up(2 * A, 128))   # lane-dense output width
    wh = jnp.zeros((H, NP), jnp.float32)
    wh = wh.at[:, :A].set(wm).at[:, A:2 * A].set(ws)
    bh = jnp.zeros((1, NP), jnp.float32)
    bh = bh.at[:, :A].set(bm).at[:, A:2 * A].set(bs)
    packed = (
        w1.astype(jnp.bfloat16), b1.astype(jnp.float32),
        w2.astype(jnp.bfloat16), b2.astype(jnp.float32),
        wh.astype(jnp.bfloat16), bh.astype(jnp.float32),
    )
    return packed, A


def _reference_forward(x, raw_params):
    """Pure-JAX reference mirroring the kernel's bf16-weight / f32-accum math."""
    w1, b1, w2, b2, wm, bm, ws, bs = raw_params
    xb = x.astype(jnp.bfloat16)
    h = jnp.maximum(
        jnp.dot(xb, w1.astype(jnp.bfloat16), preferred_element_type=jnp.float32) + b1, 0.0)
    h = jnp.maximum(
        jnp.dot(h.astype(jnp.bfloat16), w2.astype(jnp.bfloat16),
                preferred_element_type=jnp.float32) + b2, 0.0)
    hb = h.astype(jnp.bfloat16)
    mean = jnp.dot(hb, wm.astype(jnp.bfloat16), preferred_element_type=jnp.float32) + bm
    log_std = jnp.clip(
        jnp.dot(hb, ws.astype(jnp.bfloat16), preferred_element_type=jnp.float32) + bs,
        -20.0, 2.0)
    return mean, jnp.exp(log_std)


if __name__ == "__main__":
    key = jax.random.PRNGKey(0)
    k_params, k_x, k_x2 = jax.random.split(key, 3)

    input_dim = 32      # module's input_dim[0]
    action_dim = 8
    hidden = 256

    raw = init_gaussian_policy_params(k_params, input_dim, action_dim, hidden)
    packed, A = pack_gaussian_policy_params(raw)

    # Small batch (single grid step).
    batch = 8
    x = jax.random.normal(k_x, (batch, input_dim), dtype=jnp.float32)
    mean, std = gaussian_policy_forward(x, packed, A)
    jax.block_until_ready((mean, std))

    ref_mean, ref_std = _reference_forward(x, raw)
    assert mean.shape == (batch, action_dim) and std.shape == (batch, action_dim)
    assert jnp.allclose(mean, ref_mean, atol=2e-3, rtol=2e-3)
    assert jnp.allclose(std, ref_std, atol=2e-3, rtol=2e-3)
    assert bool(jnp.all(std > 0.0))

    # Larger, non-multiple batch: exercises the multi-step grid + padding path.
    batch2 = 300
    x2 = jax.random.normal(k_x2, (batch2, input_dim), dtype=jnp.float32)
    mean2, std2 = gaussian_policy_forward(x2, packed, A)
    jax.block_until_ready((mean2, std2))

    ref_mean2, ref_std2 = _reference_forward(x2, raw)
    assert mean2.shape == (batch2, action_dim) and std2.shape == (batch2, action_dim)
    assert jnp.allclose(mean2, ref_mean2, atol=2e-3, rtol=2e-3)
    assert jnp.allclose(std2, ref_std2, atol=2e-3, rtol=2e-3)
    assert bool(jnp.all(std2 > 0.0))

    print("KERNEL_OK")
</pallas_src>

<mosaic_0001>
module attributes {stable_mosaic.version = 11 : i64} {
  func.func @_gaussian_policy_kernel(%arg0: i32, %arg1: memref<8x32xbf16, #tpu.memory_space<vmem>>, %arg2: memref<32x256xbf16, #tpu.memory_space<vmem>>, %arg3: memref<1x256xf32, #tpu.memory_space<vmem>>, %arg4: memref<256x256xbf16, #tpu.memory_space<vmem>>, %arg5: memref<1x256xf32, #tpu.memory_space<vmem>>, %arg6: memref<256x128xbf16, #tpu.memory_space<vmem>>, %arg7: memref<1x128xf32, #tpu.memory_space<vmem>>, %arg8: memref<8x128xf32, #tpu.memory_space<vmem>>) attributes {dimension_semantics = [#tpu.dimension_semantics<parallel>], iteration_bounds = array<i64: 1>, scalar_prefetch = 0 : i64, scratch_operands = 0 : i64, tpu.core_type = #tpu.core_type<tc>, window_params = [{transform_indices = @transform_0, window_bounds = array<i64: 8, 32>}, {pipeline_mode = #tpu.pipeline_mode<synchronous>, transform_indices = @transform_1, window_bounds = array<i64: 32, 256>}, {pipeline_mode = #tpu.pipeline_mode<synchronous>, transform_indices = @transform_2, window_bounds = array<i64: 1, 256>}, {pipeline_mode = #tpu.pipeline_mode<synchronous>, transform_indices = @transform_3, window_bounds = array<i64: 256, 256>}, {pipeline_mode = #tpu.pipeline_mode<synchronous>, transform_indices = @transform_4, window_bounds = array<i64: 1, 256>}, {pipeline_mode = #tpu.pipeline_mode<synchronous>, transform_indices = @transform_5, window_bounds = array<i64: 256, 128>}, {pipeline_mode = #tpu.pipeline_mode<synchronous>, transform_indices = @transform_6, window_bounds = array<i64: 1, 128>}, {transform_indices = @transform_7, window_bounds = array<i64: 8, 128>}]} {
    %c0 = arith.constant 0 : index
    %c0_0 = arith.constant 0 : index
    %0 = vector.load %arg1[%c0, %c0_0] : memref<8x32xbf16, #tpu.memory_space<vmem>>, vector<8x32xbf16>
    %c0_1 = arith.constant 0 : index
    %c0_2 = arith.constant 0 : index
    %1 = vector.load %arg2[%c0_1, %c0_2] : memref<32x256xbf16, #tpu.memory_space<vmem>>, vector<32x256xbf16>
    %cst = arith.constant dense<0.000000e+00> : vector<8x256xf32>
    %2 = tpu.matmul %0, %1, %cst {dimension_numbers = #tpu.dot_dimension_numbers<[1], [0], [0], [1], [0, 0, 1, 1], [], []>} : vector<8x32xbf16>, vector<32x256xbf16>, vector<8x256xf32> -> vector<8x256xf32>
    %c0_3 = arith.constant 0 : index
    %c0_4 = arith.constant 0 : index
    %3 = vector.load %arg3[%c0_3, %c0_4] : memref<1x256xf32, #tpu.memory_space<vmem>>, vector<1x256xf32>
    %4 = vector.broadcast %3 : vector<1x256xf32> to vector<8x256xf32>
    %5 = arith.addf %2, %4 : vector<8x256xf32>
    %cst_5 = arith.constant 0.000000e+00 : f32
    %6 = vector.broadcast %cst_5 : f32 to vector<8x256xf32>
    %7 = arith.maximumf %5, %6 : vector<8x256xf32>
    %8 = arith.truncf %7 : vector<8x256xf32> to vector<8x256xbf16>
    %c0_6 = arith.constant 0 : index
    %c0_7 = arith.constant 0 : index
    %9 = vector.load %arg4[%c0_6, %c0_7] : memref<256x256xbf16, #tpu.memory_space<vmem>>, vector<256x256xbf16>
    %cst_8 = arith.constant dense<0.000000e+00> : vector<8x256xf32>
    %10 = tpu.matmul %8, %9, %cst_8 {dimension_numbers = #tpu.dot_dimension_numbers<[1], [0], [0], [1], [0, 0, 1, 1], [], []>} : vector<8x256xbf16>, vector<256x256xbf16>, vector<8x256xf32> -> vector<8x256xf32>
    %c0_9 = arith.constant 0 : index
    %c0_10 = arith.constant 0 : index
    %11 = vector.load %arg5[%c0_9, %c0_10] : memref<1x256xf32, #tpu.memory_space<vmem>>, vector<1x256xf32>
    %12 = vector.broadcast %11 : vector<1x256xf32> to vector<8x256xf32>
    %13 = arith.addf %10, %12 : vector<8x256xf32>
    %cst_11 = arith.constant 0.000000e+00 : f32
    %14 = vector.broadcast %cst_11 : f32 to vector<8x256xf32>
    %15 = arith.maximumf %13, %14 : vector<8x256xf32>
    %16 = arith.truncf %15 : vector<8x256xf32> to vector<8x256xbf16>
    %c0_12 = arith.constant 0 : index
    %c0_13 = arith.constant 0 : index
    %17 = vector.load %arg6[%c0_12, %c0_13] : memref<256x128xbf16, #tpu.memory_space<vmem>>, vector<256x128xbf16>
    %cst_14 = arith.constant dense<0.000000e+00> : vector<8x128xf32>
    %18 = tpu.matmul %16, %17, %cst_14 {dimension_numbers = #tpu.dot_dimension_numbers<[1], [0], [0], [1], [0, 0, 1, 1], [], []>} : vector<8x256xbf16>, vector<256x128xbf16>, vector<8x128xf32> -> vector<8x128xf32>
    %c0_15 = arith.constant 0 : index
    %c0_16 = arith.constant 0 : index
    %19 = vector.load %arg7[%c0_15, %c0_16] : memref<1x128xf32, #tpu.memory_space<vmem>>, vector<1x128xf32>
    %20 = vector.broadcast %19 : vector<1x128xf32> to vector<8x128xf32>
    %21 = arith.addf %18, %20 : vector<8x128xf32>
    %22 = tpu.iota {dimensions = array<i32: 1>} : vector<8x128xi32>
    %c8_i32 = arith.constant 8 : i32
    %23 = vector.broadcast %c8_i32 : i32 to vector<8x128xi32>
    %24 = arith.cmpi sge, %22, %23 : vector<8x128xi32>
    %c16_i32 = arith.constant 16 : i32
    %25 = vector.broadcast %c16_i32 : i32 to vector<8x128xi32>
    %26 = arith.cmpi slt, %22, %25 : vector<8x128xi32>
    %27 = arith.andi %24, %26 : vector<8x128xi1>
    %cst_17 = arith.constant -2.000000e+01 : f32
    %cst_18 = arith.constant 2.000000e+00 : f32
    %28 = vector.broadcast %cst_17 : f32 to vector<8x128xf32>
    %29 = arith.maximumf %28, %21 : vector<8x128xf32>
    %30 = vector.broadcast %cst_18 : f32 to vector<8x128xf32>
    %31 = arith.minimumf %30, %29 : vector<8x128xf32>
    %32 = math.exp %31 : vector<8x128xf32>
    %33 = arith.select %27, %32, %21 : vector<8x128xi1>, vector<8x128xf32>
    %c0_19 = arith.constant 0 : index
    %c0_20 = arith.constant 0 : index
    %34 = vector.load %arg8[%c0_19, %c0_20] : memref<8x128xf32, #tpu.memory_space<vmem>>, vector<8x128xf32>
    tpu.vector_store %arg8[%c0_19, %c0_20], %33 {strides = array<i32>} : memref<8x128xf32, #tpu.memory_space<vmem>>, vector<8x128xf32>,
    return
  }
  func.func @transform_0(%arg0: i32) -> (i32, i32) {
    %c0_i32 = arith.constant 0 : i32
    %c0_i32_0 = arith.constant 0 : i32
    return %arg0, %c0_i32 : i32, i32
  }
  func.func @transform_1(%arg0: i32) -> (i32, i32) {
    %c0_i32 = arith.constant 0 : i32
    %c0_i32_0 = arith.constant 0 : i32
    %c0_i32_1 = arith.constant 0 : i32
    return %c0_i32, %c0_i32_0 : i32, i32
  }
  func.func @transform_2(%arg0: i32) -> (i32, i32) {
    %c0_i32 = arith.constant 0 : i32
    %c0_i32_0 = arith.constant 0 : i32
    %c0_i32_1 = arith.constant 0 : i32
    return %c0_i32, %c0_i32_0 : i32, i32
  }
  func.func @transform_3(%arg0: i32) -> (i32, i32) {
    %c0_i32 = arith.constant 0 : i32
    %c0_i32_0 = arith.constant 0 : i32
    %c0_i32_1 = arith.constant 0 : i32
    return %c0_i32, %c0_i32_0 : i32, i32
  }
  func.func @transform_4(%arg0: i32) -> (i32, i32) {
    %c0_i32 = arith.constant 0 : i32
    %c0_i32_0 = arith.constant 0 : i32
    %c0_i32_1 = arith.constant 0 : i32
    return %c0_i32, %c0_i32_0 : i32, i32
  }
  func.func @transform_5(%arg0: i32) -> (i32, i32) {
    %c0_i32 = arith.constant 0 : i32
    %c0_i32_0 = arith.constant 0 : i32
    %c0_i32_1 = arith.constant 0 : i32
    return %c0_i32, %c0_i32_0 : i32, i32
  }
  func.func @transform_6(%arg0: i32) -> (i32, i32) {
    %c0_i32 = arith.constant 0 : i32
    %c0_i32_0 = arith.constant 0 : i32
    %c0_i32_1 = arith.constant 0 : i32
    return %c0_i32, %c0_i32_0 : i32, i32
  }
  func.func @transform_7(%arg0: i32) -> (i32, i32) {
    %c0_i32 = arith.constant 0 : i32
    %c0_i32_0 = arith.constant 0 : i32
    return %arg0, %c0_i32 : i32, i32
  }
}

</mosaic_0001>

<llo_original>
// kernel: gaussian_policy_forward.1
$region0: #{gaussian_policy_forward.1}
  #allocation0 [shape = 'u32[]', space=smem, size = 0x4, offset = 0x4, fixed_abs, tag = 'smem constant byte address 0x4 - core index']
  #allocation1 [shape = 'u32[144,128]{1,0:T(1,128)}', space=vmem, size = 0x12000, scoped, tag = 'internal scratch']
  %s0 = inlined_call_operand.vmem [shape: bf16[8,32], index: 0, kind: input, shape index: {}]
  %s1 = inlined_call_operand.hbm [shape: bf16[32,256], index: 1, kind: input, shape index: {}]
  %s2 = inlined_call_operand.vmem [shape: f32[1,256], index: 2, kind: input, shape index: {}]
  %s3 = inlined_call_operand.hbm [shape: bf16[256,256], index: 3, kind: input, shape index: {}]
  %s4 = inlined_call_operand.vmem [shape: f32[1,256], index: 4, kind: input, shape index: {}]
  %s5 = inlined_call_operand.hbm [shape: bf16[256,128], index: 5, kind: input, shape index: {}]
  %s6 = inlined_call_operand.vmem [shape: f32[1,128], index: 6, kind: input, shape index: {}]
  %s7 = inlined_call_operand.vmem [shape: f32[8,128], index: 7, kind: output, shape index: {}]
  %s8 = sld [smem:[#allocation0]]
  $region50: #{gaussian_policy_forward.1} parent=0
    _
  %s10 = ssub.s32 1, %s8
  %s11 = scalar_select 0, %s10, %s8
  $region1: #{gaussian_policy_forward.1} parent=0
    #allocation2 [shape = 'u8[16384]{0}', space=vmem, size = 0x4000, scoped, tag = 'input window, operand 1, single buffered']
    #allocation3 [shape = 's32[1]{0}', space=sflag, size = 0x4, scoped, tag = 'scoped memory for gaussian_policy_forward.1']
    #allocation4 [shape = 'u8[131072]{0}', space=vmem, size = 0x20000, scoped, tag = 'input window, operand 3, single buffered']
    #allocation5 [shape = 's32[1]{0}', space=sflag, size = 0x4, scoped, tag = 'scoped memory for gaussian_policy_forward.1']
    #allocation6 [shape = 'u8[65536]{0}', space=vmem, size = 0x10000, scoped, tag = 'input window, operand 5, single buffered']
    %12 = vsyncpa [#allocation3], 0
    %13 = vsyncpa [#allocation5], 0
    // Predicated region
    $region2: #{gaussian_policy_forward.1} parent=1 // pred_check
      _
    $region3: #{gaussian_policy_forward.1} parent=1 // pred_check_branch
      %15 = sbr.rel (0) target = $region5
    $region4: #{gaussian_policy_forward.1} parent=1 // pred_region
      _
    $region5: #{gaussian_policy_forward.1} parent=1 // pred_fallthru
      _
    // Predicated region
    $region6: #{gaussian_policy_forward.1} parent=1 // pred_check
      _
    $region7: #{gaussian_policy_forward.1} parent=1 // pred_check_branch
      %17 = sbr.rel (0) target = $region9
    $region8: #{gaussian_policy_forward.1} parent=1 // pred_region
      %s19 = ssub.s32 512, 512
      %20 = vsyncadd [#allocation3], %s19
      %s21 = sshll.u32 [#allocation2], 4
      %s22 = int_to_ptr.vmem [resolvable:$true] %s21
      %27 = dma.hbm_to_vmem [thread:$0]  %s1, 512, %s22, [#allocation3], 128, 128, 8
    $region9: #{gaussian_policy_forward.1} parent=1 // pred_fallthru
      _
    // Predicated region
    $region10: #{gaussian_policy_forward.1} parent=1 // pred_check
      _
    $region11: #{gaussian_policy_forward.1} parent=1 // pred_check_branch
      %29 = sbr.rel (0) target = $region13
    $region12: #{gaussian_policy_forward.1} parent=1 // pred_region
      _
    $region13: #{gaussian_policy_forward.1} parent=1 // pred_fallthru
      _
    // Predicated region
    $region14: #{gaussian_policy_forward.1} parent=1 // pred_check
      _
    $region15: #{gaussian_policy_forward.1} parent=1 // pred_check_branch
      %31 = sbr.rel (0) target = $region17
    $region16: #{gaussian_policy_forward.1} parent=1 // pred_region
      %s33 = ssub.s32 4096, 4096
      %34 = vsyncadd [#allocation5], %s33
      %s35 = sshll.u32 [#allocation4], 4
      %s36 = int_to_ptr.vmem [resolvable:$true] %s35
      %41 = dma.hbm_to_vmem [thread:$0]  %s3, 4096, %s36, [#allocation5], 128, 128, 8
    $region17: #{gaussian_policy_forward.1} parent=1 // pred_fallthru
      _
    // Predicated region
    $region18: #{gaussian_policy_forward.1} parent=1 // pred_check
      _
    $region19: #{gaussian_policy_forward.1} parent=1 // pred_check_branch
      %43 = sbr.rel (0) target = $region21
    $region20: #{gaussian_policy_forward.1} parent=1 // pred_region
      _
    $region21: #{gaussian_policy_forward.1} parent=1 // pred_fallthru
      _
    // Predicated region
    $region22: #{gaussian_policy_forward.1} parent=1 // pred_check
      _
    $region23: #{gaussian_policy_forward.1} parent=1 // pred_check_branch
      %45 = sbr.rel (0) target = $region25
    $region24: #{gaussian_policy_forward.1} parent=1 // pred_region
      %s47 = ssub.s32 2048, 2048
      %48 = vsyncadd [#allocation5], %s47
      %s49 = sshll.u32 [#allocation6], 4
      %s50 = int_to_ptr.vmem [resolvable:$true] %s49
      %55 = dma.hbm_to_vmem [thread:$0]  %s5, 2048, %s50, [#allocation5], 64, 64, 4
    $region25: #{gaussian_policy_forward.1} parent=1 // pred_fallthru
      _
    // Predicated region
    $region26: #{gaussian_policy_forward.1} parent=1 // pred_check
      _
    $region27: #{gaussian_policy_forward.1} parent=1 // pred_check_branch
      %57 = sbr.rel (0) target = $region29
    $region28: #{gaussian_policy_forward.1} parent=1 // pred_region
      _
    $region29: #{gaussian_policy_forward.1} parent=1 // pred_fallthru
      _
    // Predicated region
    $region30: #{gaussian_policy_forward.1} parent=1 // pred_check
      _
    $region31: #{gaussian_policy_forward.1} parent=1 // pred_check_branch
      %59 = sbr.rel (0) target = $region33
    $region32: #{gaussian_policy_forward.1} parent=1 // pred_region
      %60 = dma.done [#allocation3], 512
    $region33: #{gaussian_policy_forward.1} parent=1 // pred_fallthru
      _
    // Predicated region
    $region34: #{gaussian_policy_forward.1} parent=1 // pred_check
      _
    $region35: #{gaussian_policy_forward.1} parent=1 // pred_check_branch
      %62 = sbr.rel (0) target = $region37
    $region36: #{gaussian_policy_forward.1} parent=1 // pred_region
      %63 = dma.done [#allocation5], 4096
    $region37: #{gaussian_policy_forward.1} parent=1 // pred_fallthru
      _
    // Predicated region
    $region38: #{gaussian_policy_forward.1} parent=1 // pred_check
      _
    $region39: #{gaussian_policy_forward.1} parent=1 // pred_check_branch
      %65 = sbr.rel (0) target = $region41
    $region40: #{gaussian_policy_forward.1} parent=1 // pred_region
      %66 = dma.done [#allocation5], 2048
    $region41: #{gaussian_policy_forward.1} parent=1 // pred_fallthru
      _
    %v68 = vld [vmem:[%s0] sm:$0xf]
    %v69 = vld [vmem:[#allocation2] sm:$0xff]
    %v70 = vld [vmem:[#allocation2 + $0x8] sm:$0xff]
    %v71 = vld [vmem:[#allocation2 + $0x10] sm:$0xff]
    %v72 = vld [vmem:[#allocation2 + $0x18] sm:$0xff]
    %v73 = vld [vmem:[%s2] sm:$0x3]
    %v75 = vlaneseq
    %v76 = vshrl.u32 %v75, 7
    %v77 = vsub.s32 0, %v76
    %v78 = vrot.slane %v73, %v77
    %v79 = vlaneseq
    %v80 = vshrl.u32 %v79, 7
    %v81 = vsub.s32 1, %v80
    %v82 = vrot.slane %v73, %v81
    %v89 = vunpack.c.l.b16 %v69
    %v90 = vunpack.c.h.b16 %v69
    %v91 = vunpack.c.l.b16 %v70
    %v92 = vunpack.c.h.b16 %v70
    %v93 = vunpack.c.l.b16 %v71
    %v94 = vunpack.c.h.b16 %v71
    %v95 = vunpack.c.l.b16 %v72
    %v96 = vunpack.c.h.b16 %v72
    %v97 = vpack.c.b16 %v91, %v89
    %v98 = vpack.c.b16 %v92, %v90
    %v99 = vpack.c.b16 %v95, %v93
    %v100 = vpack.c.b16 %v96, %v94
    %vm105 = vcmask 261120
    %v107 = vsel %vm105, %v68, 0
    %109 = vmatprep.subr.bf16.mxu0 0
    %110 = vmatpush1.bf16.msra.mxu0 0
    %111 = vmatprep.subr.bf16.mxu0 0
    %112 = vmatpush1.bf16.msra.mxu0 0
    %113 = vmatprep.subr.bf16.mxu0 0
    %114 = vmatpush1.bf16.msra.mxu0 0
    %115 = vmatprep.subr.bf16.mxu0 0
    %116 = vmatpush1.bf16.msra.mxu0 0
    %117 = vmatprep.subr.bf16.mxu0 0
    %118 = vmatpush1.bf16.msra.mxu0 0
    %119 = vmatprep.subr.bf16.mxu0 0
    %120 = vmatpush1.bf16.msra.mxu0 0
    %121 = vmatprep.subr.bf16.mxu0 %v100
    %122 = vmatpush1.bf16.msra.mxu0 %v99
    %123 = vmatprep.subr.bf16.mxu0 %v98
    %124 = vmatpush1.bf16.msra.mxu0 %v97
    %125 = vmatprep.subr.bf16.mxu0 0
    %126 = vmatpush2.bf16.msra.mxu0 0
    %127 = vmatprep.subr.bf16.mxu0 0
    %128 = vmatpush2.bf16.msra.mxu0 0
    %129 = vmatprep.subr.bf16.mxu0 0
    %130 = vmatpush2.bf16.msra.mxu0 0
    %131 = vmatprep.subr.bf16.mxu0 0
    %132 = vmatpush2.bf16.msra.mxu0 0
    %133 = vmatprep.subr.bf16.mxu0 0
    %134 = vmatpush2.bf16.msra.mxu0 0
    %135 = vmatprep.subr.bf16.mxu0 0
    %136 = vmatpush2.bf16.msra.mxu0 0
    %137 = vmatprep.subr.bf16.mxu0 0
    %138 = vmatpush2.bf16.msra.mxu0 0
    %139 = vmatprep.subr.bf16.mxu0 0
    %140 = vmatpush2.bf16.msra.mxu0 0
    %141 = vmatprep.mubr.bf16.mxu0 0
    %142 = vmatmul.mubr.bf16.gmra.mxu0 %v107
    %v143 = vpop.f32.mrf.mxu0
    %v144 = vadd.f32 %v78, %v143
    %v145 = vpop.f32.mrf.mxu0
    %v146 = vadd.f32 %v82, %v145
    %v147 = vpop.f32.mrf.mxu0
    %v148 = vpop.f32.mrf.mxu0
    %149 = vdwg.mxu0
    %v150 = vmax.f32 %v144, 0.0
    %v151 = vmax.f32 %v146, 0.0
    %v152 = vpack.c.bf16 %v150, %v150
    %v153 = vpack.c.bf16 %v151, %v151
    %v154 = vld [vmem:[#allocation4] sm:$0xff]
    %v155 = vld [vmem:[#allocation4 + $0x8] sm:$0xff]
    %v156 = vld [vmem:[#allocation4 + $0x10] sm:$0xff]
    %v157 = vld [vmem:[#allocation4 + $0x18] sm:$0xff]
    %v158 = vld [vmem:[#allocation4 + $0x20] sm:$0xff]
    %v159 = vld [vmem:[#allocation4 + $0x28] sm:$0xff]
    %v160 = vld [vmem:[#allocation4 + $0x30] sm:$0xff]
    %v161 = vld [vmem:[#allocation4 + $0x38] sm:$0xff]
    %v162 = vld [vmem:[#allocation4 + $0x40] sm:$0xff]
    %v163 = vld [vmem:[#allocation4 + $0x48] sm:$0xff]
    %v164 = vld [vmem:[#allocation4 + $0x50] sm:$0xff]
    %v165 = vld [vmem:[#allocation4 + $0x58] sm:$0xff]
    %v166 = vld [vmem:[#allocation4 + $0x60] sm:$0xff]
    %v167 = vld [vmem:[#allocation4 + $0x68] sm:$0xff]
    %v168 = vld [vmem:[#allocation4 + $0x70] sm:$0xff]
    %v169 = vld [vmem:[#allocation4 + $0x78] sm:$0xff]
    %v170 = vld [vmem:[#allocation4 + $0x80] sm:$0xff]
    %v171 = vld [vmem:[#allocation4 + $0x88] sm:$0xff]
    %v172 = vld [vmem:[#allocation4 + $0x90] sm:$0xff]
    %v173 = vld [vmem:[#allocation4 + $0x98] sm:$0xff]
    %v174 = vld [vmem:[#allocation4 + $0xa0] sm:$0xff]
    %v175 = vld [vmem:[#allocation4 + $0xa8] sm:$0xff]
    %v176 = vld [vmem:[#allocation4 + $0xb0] sm:$0xff]
    %v177 = vld [vmem:[#allocation4 + $0xb8] sm:$0xff]
    %v178 = vld [vmem:[#allocation4 + $0xc0] sm:$0xff]
    %v179 = vld [vmem:[#allocation4 + $0xc8] sm:$0xff]
    %v180 = vld [vmem:[#allocation4 + $0xd0] sm:$0xff]
    %v181 = vld [vmem:[#allocation4 + $0xd8] sm:$0xff]
    %v182 = vld [vmem:[#allocation4 + $0xe0] sm:$0xff]
    %v183 = vld [vmem:[#allocation4 + $0xe8] sm:$0xff]
    %v184 = vld [vmem:[#allocation4 + $0xf0] sm:$0xff]
    %v185 = vld [vmem:[#allocation4 + $0xf8] sm:$0xff]
    %v186 = vld [vmem:[%s4] sm:$0x3]
    %v188 = vlaneseq
    %v189 = vshrl.u32 %v188, 7
    %v190 = vsub.s32 0, %v189
    %v191 = vrot.slane %v186, %v190
    %v192 = vlaneseq
    %v193 = vshrl.u32 %v192, 7
    %v194 = vsub.s32 1, %v193
    %v195 = vrot.slane %v186, %v194
    %v230 = vunpack.c.l.b16 %v154
    %v231 = vunpack.c.h.b16 %v154
    %v232 = vunpack.c.l.b16 %v155
    %v233 = vunpack.c.h.b16 %v155
    %v234 = vunpack.c.l.b16 %v156
    %v235 = vunpack.c.h.b16 %v156
    %v236 = vunpack.c.l.b16 %v157
    %v237 = vunpack.c.h.b16 %v157
    %v238 = vunpack.c.l.b16 %v158
    %v239 = vunpack.c.h.b16 %v158
    %v240 = vunpack.c.l.b16 %v159
    %v241 = vunpack.c.h.b16 %v159
    %v242 = vunpack.c.l.b16 %v160
    %v243 = vunpack.c.h.b16 %v160
    %v244 = vunpack.c.l.b16 %v161
    %v245 = vunpack.c.h.b16 %v161
    %v246 = vunpack.c.l.b16 %v162
    %v247 = vunpack.c.h.b16 %v162
    %v248 = vunpack.c.l.b16 %v163
    %v249 = vunpack.c.h.b16 %v163
    %v250 = vunpack.c.l.b16 %v164
    %v251 = vunpack.c.h.b16 %v164
    %v252 = vunpack.c.l.b16 %v165
    %v253 = vunpack.c.h.b16 %v165
    %v254 = vunpack.c.l.b16 %v166
    %v255 = vunpack.c.h.b16 %v166
    %v256 = vunpack.c.l.b16 %v167
    %v257 = vunpack.c.h.b16 %v167
    %v258 = vunpack.c.l.b16 %v168
    %v259 = vunpack.c.h.b16 %v168
    %v260 = vunpack.c.l.b16 %v169
    %v261 = vunpack.c.h.b16 %v169
    %v262 = vunpack.c.l.b16 %v170
    %v263 = vunpack.c.h.b16 %v170
    %v264 = vunpack.c.l.b16 %v171
    %v265 = vunpack.c.h.b16 %v171
    %v266 = vunpack.c.l.b16 %v172
    %v267 = vunpack.c.h.b16 %v172
    %v268 = vunpack.c.l.b16 %v173
    %v269 = vunpack.c.h.b16 %v173
    %v270 = vunpack.c.l.b16 %v174
    %v271 = vunpack.c.h.b16 %v174
    %v272 = vunpack.c.l.b16 %v175
    %v273 = vunpack.c.h.b16 %v175
    %v274 = vunpack.c.l.b16 %v176
    %v275 = vunpack.c.h.b16 %v176
    %v276 = vunpack.c.l.b16 %v177
    %v277 = vunpack.c.h.b16 %v177
    %v278 = vunpack.c.l.b16 %v178
    %v279 = vunpack.c.h.b16 %v178
    %v280 = vunpack.c.l.b16 %v179
    %v281 = vunpack.c.h.b16 %v179
    %v282 = vunpack.c.l.b16 %v180
    %v283 = vunpack.c.h.b16 %v180
    %v284 = vunpack.c.l.b16 %v181
    %v285 = vunpack.c.h.b16 %v181
    %v286 = vunpack.c.l.b16 %v182
    %v287 = vunpack.c.h.b16 %v182
    %v288 = vunpack.c.l.b16 %v183
    %v289 = vunpack.c.h.b16 %v183
    %v290 = vunpack.c.l.b16 %v184
    %v291 = vunpack.c.h.b16 %v184
    %v292 = vunpack.c.l.b16 %v185
    %v293 = vunpack.c.h.b16 %v185
    %v294 = vpack.c.b16 %v232, %v230
    %v295 = vpack.c.b16 %v233, %v231
    %v296 = vpack.c.b16 %v236, %v234
    %v297 = vpack.c.b16 %v237, %v235
    %v298 = vpack.c.b16 %v240, %v238
    %v299 = vpack.c.b16 %v241, %v239
    %v300 = vpack.c.b16 %v244, %v242
    %v301 = vpack.c.b16 %v245, %v243
    %v302 = vpack.c.b16 %v248, %v246
    %v303 = vpack.c.b16 %v249, %v247
    %v304 = vpack.c.b16 %v252, %v250
    %v305 = vpack.c.b16 %v253, %v251
    %v306 = vpack.c.b16 %v256, %v254
    %v307 = vpack.c.b16 %v257, %v255
    %v308 = vpack.c.b16 %v260, %v258
    %v309 = vpack.c.b16 %v261, %v259
    %v310 = vpack.c.b16 %v264, %v262
    %v311 = vpack.c.b16 %v265, %v263
    %v312 = vpack.c.b16 %v268, %v266
    %v313 = vpack.c.b16 %v269, %v267
    %v314 = vpack.c.b16 %v272, %v270
    %v315 = vpack.c.b16 %v273, %v271
    %v316 = vpack.c.b16 %v276, %v274
    %v317 = vpack.c.b16 %v277, %v275
    %v318 = vpack.c.b16 %v280, %v278
    %v319 = vpack.c.b16 %v281, %v279
    %v320 = vpack.c.b16 %v284, %v282
    %v321 = vpack.c.b16 %v285, %v283
    %v322 = vpack.c.b16 %v288, %v286
    %v323 = vpack.c.b16 %v289, %v287
    %v324 = vpack.c.b16 %v292, %v290
    %v325 = vpack.c.b16 %v293, %v291
    %358 = vmatprep.subr.bf16.mxu0 %v309
    %359 = vmatpush1.bf16.msra.mxu0 %v308
    %360 = vmatprep.subr.bf16.mxu0 %v307
    %361 = vmatpush1.bf16.msra.mxu0 %v306
    %362 = vmatprep.subr.bf16.mxu0 %v305
    %363 = vmatpush1.bf16.msra.mxu0 %v304
    %364 = vmatprep.subr.bf16.mxu0 %v303
    %365 = vmatpush1.bf16.msra.mxu0 %v302
    %366 = vmatprep.subr.bf16.mxu0 %v301
    %367 = vmatpush1.bf16.msra.mxu0 %v300
    %368 = vmatprep.subr.bf16.mxu0 %v299
    %369 = vmatpush1.bf16.msra.mxu0 %v298
    %370 = vmatprep.subr.bf16.mxu0 %v297
    %371 = vmatpush1.bf16.msra.mxu0 %v296
    %372 = vmatprep.subr.bf16.mxu0 %v295
    %373 = vmatpush1.bf16.msra.mxu0 %v294
    %374 = vmatprep.subr.bf16.mxu0 %v325
    %375 = vmatpush2.bf16.msra.mxu0 %v324
    %376 = vmatprep.subr.bf16.mxu0 %v323
    %377 = vmatpush2.bf16.msra.mxu0 %v322
    %378 = vmatprep.subr.bf16.mxu0 %v321
    %379 = vmatpush2.bf16.msra.mxu0 %v320
    %380 = vmatprep.subr.bf16.mxu0 %v319
    %381 = vmatpush2.bf16.msra.mxu0 %v318
    %382 = vmatprep.subr.bf16.mxu0 %v317
    %383 = vmatpush2.bf16.msra.mxu0 %v316
    %384 = vmatprep.subr.bf16.mxu0 %v315
    %385 = vmatpush2.bf16.msra.mxu0 %v314
    %386 = vmatprep.subr.bf16.mxu0 %v313
    %387 = vmatpush2.bf16.msra.mxu0 %v312
    %388 = vmatprep.subr.bf16.mxu0 %v311
    %389 = vmatpush2.bf16.msra.mxu0 %v310
    %390 = vmatprep.mubr.bf16.mxu0 %v153
    %391 = vmatmul.mubr.bf16.gmra.mxu0 %v152
    %v392 = vpop.f32.mrf.mxu0
    %v393 = vadd.f32 %v191, %v392
    %v394 = vpop.f32.mrf.mxu0
    %v395 = vadd.f32 %v195, %v394
    %v396 = vpop.f32.mrf.mxu0
    %v397 = vpop.f32.mrf.mxu0
    %398 = vdwg.mxu0
    %v399 = vmax.f32 %v393, 0.0
    %v400 = vmax.f32 %v395, 0.0
    %v401 = vpack.c.bf16 %v399, %v399
    %v402 = vpack.c.bf16 %v400, %v400
    %v403 = vld [vmem:[#allocation6] sm:$0xf]
    %v404 = vld [vmem:[#allocation6 + $0x4] sm:$0xf]
    %v405 = vld [vmem:[#allocation6 + $0x8] sm:$0xf]
    %v406 = vld [vmem:[#allocation6 + $0xc] sm:$0xf]
    %v407 = vld [vmem:[#allocation6 + $0x10] sm:$0xf]
    %v408 = vld [vmem:[#allocation6 + $0x14] sm:$0xf]
    %v409 = vld [vmem:[#allocation6 + $0x18] sm:$0xf]
    %v410 = vld [vmem:[#allocation6 + $0x1c] sm:$0xf]
    %v411 = vld [vmem:[#allocation6 + $0x20] sm:$0xf]
    %v412 = vld [vmem:[#allocation6 + $0x24] sm:$0xf]
    %v413 = vld [vmem:[#allocation6 + $0x28] sm:$0xf]
    %v414 = vld [vmem:[#allocation6 + $0x2c] sm:$0xf]
    %v415 = vld [vmem:[#allocation6 + $0x30] sm:$0xf]
    %v416 = vld [vmem:[#allocation6 + $0x34] sm:$0xf]
    %v417 = vld [vmem:[#allocation6 + $0x38] sm:$0xf]
    %v418 = vld [vmem:[#allocation6 + $0x3c] sm:$0xf]
    %v419 = vld [vmem:[#allocation6 + $0x40] sm:$0xf]
    %v420 = vld [vmem:[#allocation6 + $0x44] sm:$0xf]
    %v421 = vld [vmem:[#allocation6 + $0x48] sm:$0xf]
    %v422 = vld [vmem:[#allocation6 + $0x4c] sm:$0xf]
    %v423 = vld [vmem:[#allocation6 + $0x50] sm:$0xf]
    %v424 = vld [vmem:[#allocation6 + $0x54] sm:$0xf]
    %v425 = vld [vmem:[#allocation6 + $0x58] sm:$0xf]
    %v426 = vld [vmem:[#allocation6 + $0x5c] sm:$0xf]
    %v427 = vld [vmem:[#allocation6 + $0x60] sm:$0xf]
    %v428 = vld [vmem:[#allocation6 + $0x64] sm:$0xf]
    %v429 = vld [vmem:[#allocation6 + $0x68] sm:$0xf]
    %v430 = vld [vmem:[#allocation6 + $0x6c] sm:$0xf]
    %v431 = vld [vmem:[#allocation6 + $0x70] sm:$0xf]
    %v432 = vld [vmem:[#allocation6 + $0x74] sm:$0xf]
    %v433 = vld [vmem:[#allocation6 + $0x78] sm:$0xf]
    %v434 = vld [vmem:[#allocation6 + $0x7c] sm:$0xf]
    %v435 = vld [vmem:[%s6] sm:$0x1]
    %v437 = vlaneseq
    %v438 = vshrl.u32 %v437, 7
    %v439 = vsub.s32 0, %v438
    %v440 = vrot.slane %v435, %v439
    %v474 = vunpack.c.l.b16 %v403
    %v475 = vunpack.c.l.b16 %v404
    %v476 = vunpack.c.l.b16 %v405
    %v477 = vunpack.c.l.b16 %v406
    %v478 = vunpack.c.l.b16 %v407
    %v479 = vunpack.c.l.b16 %v408
    %v480 = vunpack.c.l.b16 %v409
    %v481 = vunpack.c.l.b16 %v410
    %v482 = vunpack.c.l.b16 %v411
    %v483 = vunpack.c.l.b16 %v412
    %v484 = vunpack.c.l.b16 %v413
    %v485 = vunpack.c.l.b16 %v414
    %v486 = vunpack.c.l.b16 %v415
    %v487 = vunpack.c.l.b16 %v416
    %v488 = vunpack.c.l.b16 %v417
    %v489 = vunpack.c.l.b16 %v418
    %v490 = vunpack.c.l.b16 %v419
    %v491 = vunpack.c.l.b16 %v420
    %v492 = vunpack.c.l.b16 %v421
    %v493 = vunpack.c.l.b16 %v422
    %v494 = vunpack.c.l.b16 %v423
    %v495 = vunpack.c.l.b16 %v424
    %v496 = vunpack.c.l.b16 %v425
    %v497 = vunpack.c.l.b16 %v426
    %v498 = vunpack.c.l.b16 %v427
    %v499 = vunpack.c.l.b16 %v428
    %v500 = vunpack.c.l.b16 %v429
    %v501 = vunpack.c.l.b16 %v430
    %v502 = vunpack.c.l.b16 %v431
    %v503 = vunpack.c.l.b16 %v432
    %v504 = vunpack.c.l.b16 %v433
    %v505 = vunpack.c.l.b16 %v434
    %v506 = vpack.c.b16 %v475, %v474
    %v507 = vpack.c.b16 %v477, %v476
    %v508 = vpack.c.b16 %v479, %v478
    %v509 = vpack.c.b16 %v481, %v480
    %v510 = vpack.c.b16 %v483, %v482
    %v511 = vpack.c.b16 %v485, %v484
    %v512 = vpack.c.b16 %v487, %v486
    %v513 = vpack.c.b16 %v489, %v488
    %v514 = vpack.c.b16 %v491, %v490
    %v515 = vpack.c.b16 %v493, %v492
    %v516 = vpack.c.b16 %v495, %v494
    %v517 = vpack.c.b16 %v497, %v496
    %v518 = vpack.c.b16 %v499, %v498
    %v519 = vpack.c.b16 %v501, %v500
    %v520 = vpack.c.b16 %v503, %v502
    %v521 = vpack.c.b16 %v505, %v504
    %538 = vmatprep.subr.bf16.mxu0 0
    %539 = vmatpush1.bf16.msra.mxu0 %v513
    %540 = vmatprep.subr.bf16.mxu0 0
    %541 = vmatpush1.bf16.msra.mxu0 %v512
    %542 = vmatprep.subr.bf16.mxu0 0
    %543 = vmatpush1.bf16.msra.mxu0 %v511
    %544 = vmatprep.subr.bf16.mxu0 0
    %545 = vmatpush1.bf16.msra.mxu0 %v510
    %546 = vmatprep.subr.bf16.mxu0 0
    %547 = vmatpush1.bf16.msra.mxu0 %v509
    %548 = vmatprep.subr.bf16.mxu0 0
    %549 = vmatpush1.bf16.msra.mxu0 %v508
    %550 = vmatprep.subr.bf16.mxu0 0
    %551 = vmatpush1.bf16.msra.mxu0 %v507
    %552 = vmatprep.subr.bf16.mxu0 0
    %553 = vmatpush1.bf16.msra.mxu0 %v506
    %554 = vmatprep.subr.bf16.mxu0 0
    %555 = vmatpush2.bf16.msra.mxu0 %v521
    %556 = vmatprep.subr.bf16.mxu0 0
    %557 = vmatpush2.bf16.msra.mxu0 %v520
    %558 = vmatprep.subr.bf16.mxu0 0
    %559 = vmatpush2.bf16.msra.mxu0 %v519
    %560 = vmatprep.subr.bf16.mxu0 0
    %561 = vmatpush2.bf16.msra.mxu0 %v518
    %562 = vmatprep.subr.bf16.mxu0 0
    %563 = vmatpush2.bf16.msra.mxu0 %v517
    %564 = vmatprep.subr.bf16.mxu0 0
    %565 = vmatpush2.bf16.msra.mxu0 %v516
    %566 = vmatprep.subr.bf16.mxu0 0
    %567 = vmatpush2.bf16.msra.mxu0 %v515
    %568 = vmatprep.subr.bf16.mxu0 0
    %569 = vmatpush2.bf16.msra.mxu0 %v514
    %570 = vmatprep.mubr.bf16.mxu0 %v402
    %571 = vmatmul.mubr.bf16.gmra.mxu0 %v401
    %v572 = vpop.f32.mrf.mxu0
    %v573 = vadd.f32 %v440, %v572
    %v574 = vpop.f32.mrf.mxu0
    %v575 = vpop.f32.mrf.mxu0
    %v576 = vpop.f32.mrf.mxu0
    %577 = vdwg.mxu0
    %v578 = vlaneseq
    %v579 = vand.u32 %v578, 127
    %vm580 = vcmp.ge.s32.totalorder %v579, 8
    %vm581 = vcmp.lt.s32.totalorder %v579, 16
    %vm582 = vmand %vm580, %vm581
    %v583 = vmax.f32 %v573, -20.0
    %v584 = vmin.f32 %v583, 2.0
    %v585 = vmul.f32 %v584, 1.442695
    %v586 = vpow.pop %v585
    %v587 = vsel %vm582, %v586, %v573
    %588 = vst [vmem:[%s7] sm:$0xff] %v587
    // Predicated region
    $region42: #{gaussian_policy_forward.1} parent=1 // pred_check
      _
    $region43: #{gaussian_policy_forward.1} parent=1 // pred_check_branch
      %590 = sbr.rel (0) target = $region45
    $region44: #{gaussian_policy_forward.1} parent=1 // pred_region
      _
    $region45: #{gaussian_policy_forward.1} parent=1 // pred_fallthru
      _
    // Predicated region
    $region46: #{gaussian_policy_forward.1} parent=1 // pred_check
      _
    $region47: #{gaussian_policy_forward.1} parent=1 // pred_check_branch
      %592 = sbr.rel (0) target = $region49
    $region48: #{gaussian_policy_forward.1} parent=1 // pred_region
      _
    $region49: #{gaussian_policy_forward.1} parent=1 // pred_fallthru
      _
    %593 = vsyncpa [#allocation3], 1
    %594 = vsyncpa [#allocation5], 1

</llo_original>
